<compile_context>
chip_gen: v6e
topology: v6e:2x2x1
jax: 0.10.0
libtpu: 0.0.40
codegen_flags: <defaults>
</compile_context>

<pallas_src>
import jax
import jax.numpy as jnp
from jax import lax
from jax.experimental import pallas as pl
from jax.experimental.pallas import tpu as pltpu


def _noise_ptfix_kernel(emb_ref, noise_ref, proto_ref, labels_ref, stats_ref):
    """Single-invocation kernel over the clean set and all K noisy sets.

    emb_ref:    (N, D)       clean query embeddings (native dtype)   (VMEM)
    noise_ref:  (K*N, D)     all noisy query embeddings, flattened   (VMEM)
    proto_ref:  (P, D)       prototypes (native dtype)               (VMEM)
    labels_ref: ((K+1)*N, 1) int32 target prototype index per row
                             (rows 0..N-1 = clean, rest = noise)     (VMEM)
    stats_ref:  (8,) f32     [PTFixLoss, PNLoss, PNAcc,
                              NoisePTLoss, NoiseAcc, 0, 0, 0]        (SMEM)
    """
    n = emb_ref.shape[0]
    kn = noise_ref.shape[0]
    k = kn // n
    p_num = proto_ref.shape[0]

    # prototypes kept in native dtype for the MXU; norms computed once in f32
    p = proto_ref[...]                                            # (P, D)
    p32 = p.astype(jnp.float32)
    p_sq = jnp.sum(p32 * p32, axis=-1)[None, :]                   # (1, P) f32

    def row_stats(x, lab):
        """Sum of CE and sum of correct-prediction flags over all rows.

        x:   (M, D) native dtype
        lab: (M, 1) int32 target prototype index per row
        """
        # (M, D) x (P, D) contracting last dims -> (M, P); native-dtype
        # operands on the MXU, f32 accumulation.  No p.T materialized.
        xp = lax.dot_general(
            x, p, dimension_numbers=(((1,), (1,)), ((), ())),
            preferred_element_type=jnp.float32)                   # (M, P)
        x32 = x.astype(jnp.float32)
        x_sq = jnp.sum(x32 * x32, axis=-1, keepdims=True)         # (M, 1)
        # logits = -squared euclidean distance (f32)
        logits = 2.0 * xp - x_sq - p_sq                           # (M, P)

        # cross-entropy with integer targets
        row_max = jnp.max(logits, axis=-1, keepdims=True)         # (M, 1)
        lse = row_max + jnp.log(
            jnp.sum(jnp.exp(logits - row_max), axis=-1, keepdims=True))
        col = lax.broadcasted_iota(jnp.int32, logits.shape, 1)    # (M, P)
        target_logit = jnp.sum(jnp.where(col == lab, logits, 0.0),
                               axis=-1, keepdims=True)            # (M, 1)
        ce = lse - target_logit                                   # (M, 1)

        # exact first-occurrence argmax (matches torch.argmax under ties)
        amax = jnp.min(jnp.where(logits >= row_max, col, p_num),
                       axis=-1, keepdims=True)                    # (M, 1)
        correct = (amax == lab).astype(jnp.float32)               # (M, 1)

        return jnp.sum(ce), jnp.sum(correct)                      # scalars

    # slice the label column directly off the Ref (static, aligned slices)
    ce_c, ok_c = row_stats(emb_ref[...], labels_ref[0:n, :])
    ce_n, ok_n = row_stats(noise_ref[...], labels_ref[n:n + kn, :])

    # fold all means / weighting once
    pn_loss = ce_c / n
    pn_acc = ok_c / n
    nz_loss = ce_n / kn          # mean over all K*N rows == mean of per-set means
    nz_acc = ok_n / kn
    total = (ce_c + ce_n) / (n * (k + 1))   # sum of per-set means / (K+1)

    stats_ref[0] = total
    stats_ref[1] = pn_loss
    stats_ref[2] = pn_acc
    stats_ref[3] = nz_loss
    stats_ref[4] = nz_acc
    stats_ref[5] = jnp.float32(0.0)
    stats_ref[6] = jnp.float32(0.0)
    stats_ref[7] = jnp.float32(0.0)


def noise_ptfix_loss(prototypes, pt_labels, embeddings, noise_embedding, labels, w):
    """JAX/Pallas equivalent of NoisePTFixLoss.forward.

    prototypes:      (P, D) float
    pt_labels:       (P,)   int   class id of each prototype
    embeddings:      (N, D) float clean query embeddings
    noise_embedding: (K, N, D) float noisy query embedding sets
    labels:          (N,)   int   class ids of the queries
    """
    P, D = prototypes.shape
    N = embeddings.shape[0]
    K = noise_embedding.shape[0]
    S = K + 1

    # labels -> indices into prototypes (the pt_labels_dict remapping).
    # NOTE: labels absent from pt_labels map to prototype 0 (the PyTorch dict
    # lookup would raise KeyError instead).
    labels_idx = jnp.argmax(labels[:, None] == pt_labels[None, :],
                            axis=1).astype(jnp.int32)                 # (N,)
    # tiny per-row target-index column for all S sets (replaces (S*N,P) one-hot)
    labels_all = jnp.tile(labels_idx, S)[:, None]                      # (S*N, 1)

    # metadata-only reshape (contiguous), no HBM copy, no dtype cast
    noise_flat = noise_embedding.reshape(K * N, D)

    flops = 2 * S * N * D * P + 16 * S * N * P
    bytes_accessed = (embeddings.size * embeddings.dtype.itemsize
                      + noise_flat.size * noise_flat.dtype.itemsize
                      + prototypes.size * prototypes.dtype.itemsize
                      + labels_all.size * 4 + 8 * 4)

    stats = pl.pallas_call(
        _noise_ptfix_kernel,
        in_specs=[
            pl.BlockSpec(memory_space=pltpu.MemorySpace.VMEM),   # embeddings
            pl.BlockSpec(memory_space=pltpu.MemorySpace.VMEM),   # noise (flat)
            pl.BlockSpec(memory_space=pltpu.MemorySpace.VMEM),   # prototypes
            pl.BlockSpec(memory_space=pltpu.MemorySpace.VMEM),   # label indices
        ],
        out_specs=pl.BlockSpec(memory_space=pltpu.MemorySpace.SMEM),
        out_shape=jax.ShapeDtypeStruct((8,), jnp.float32),
        compiler_params=pltpu.CompilerParams(
            vmem_limit_bytes=64 * 1024 * 1024),
        cost_estimate=pl.CostEstimate(
            flops=flops, transcendentals=S * N * P,
            bytes_accessed=bytes_accessed),
    )(embeddings, noise_flat, prototypes, labels_all)

    total_loss = stats[0]
    log = {
        'PNAcc': stats[2],
        'PNLoss': stats[1],
        'PTFixLoss': stats[0],
        'NoisePTLoss': stats[3],
        'NoiseAcc': stats[4],
    }
    return total_loss * w, log


def _reference(prototypes, pt_labels, embeddings, noise_embedding, labels, w):
    """Plain-JAX reference reproducing the PyTorch forward, for validation."""
    labels_idx = jnp.argmax(labels[:, None] == pt_labels[None, :], axis=1)
    x = jnp.concatenate([embeddings[None], noise_embedding], axis=0).astype(jnp.float32)
    p = prototypes.astype(jnp.float32)

    def per_set(q):
        dist = jnp.sum((q[:, None, :] - p[None, :, :]) ** 2, axis=-1)
        logits = -dist
        ce = jnp.mean(
            jax.nn.logsumexp(logits, axis=-1)
            - jnp.take_along_axis(logits, labels_idx[:, None], axis=1)[:, 0])
        acc = jnp.mean((jnp.argmax(logits, axis=-1) == labels_idx).astype(jnp.float32))
        return ce, acc

    losses, accs = jax.vmap(per_set)(x)
    total = jnp.sum(losses) / x.shape[0]
    return total * w, losses, accs


if __name__ == "__main__":
    key = jax.random.PRNGKey(0)
    P, D, N, K = 4, 32, 8, 3          # prototypes, feature dim, queries, noise sets
    w = 0.5

    k1, k2, k3, k4 = jax.random.split(key, 4)
    prototypes = jax.random.normal(k1, (P, D), dtype=jnp.float32)
    embeddings = jax.random.normal(k2, (N, D), dtype=jnp.float32)
    noise_embedding = embeddings[None] + 0.1 * jax.random.normal(
        k3, (K, N, D), dtype=jnp.float32)
    pt_labels = jnp.array([5, 9, 2, 7], dtype=jnp.int32)        # arbitrary class ids
    labels = pt_labels[jax.random.randint(k4, (N,), 0, P)]       # query class ids

    loss, log = noise_ptfix_loss(
        prototypes, pt_labels, embeddings, noise_embedding, labels, w)
    loss = jax.block_until_ready(loss)
    log = jax.tree_util.tree_map(jax.block_until_ready, log)

    # sanity-check against a plain-JAX reference of the PyTorch forward
    ref_loss, ref_losses, ref_accs = _reference(
        prototypes, pt_labels, embeddings, noise_embedding, labels, w)
    S = K + 1
    assert jnp.allclose(loss, ref_loss, rtol=1e-4, atol=1e-4)
    assert jnp.allclose(log['PTFixLoss'], jnp.sum(ref_losses) / S, rtol=1e-4, atol=1e-4)
    assert jnp.allclose(log['PNLoss'], ref_losses[0], rtol=1e-4, atol=1e-4)
    assert jnp.allclose(log['PNAcc'], ref_accs[0], rtol=1e-4, atol=1e-4)
    assert jnp.allclose(log['NoisePTLoss'], jnp.mean(ref_losses[1:]), rtol=1e-4, atol=1e-4)
    assert jnp.allclose(log['NoiseAcc'], jnp.mean(ref_accs[1:]), rtol=1e-4, atol=1e-4)

    print("KERNEL_OK")
</pallas_src>

<mosaic_0001>
module attributes {stable_mosaic.version = 11 : i64} {
  func.func @_noise_ptfix_kernel(%arg0: memref<8x32xf32, #tpu.memory_space<vmem>>, %arg1: memref<24x32xf32, #tpu.memory_space<vmem>>, %arg2: memref<4x32xf32, #tpu.memory_space<vmem>>, %arg3: memref<32x1xi32, #tpu.memory_space<vmem>>, %arg4: memref<8xf32, #tpu.memory_space<smem>>) attributes {dimension_semantics = [], scalar_prefetch = 0 : i64, scratch_operands = 0 : i64, tpu.core_type = #tpu.core_type<tc>} {
    %c0 = arith.constant 0 : index
    %c0_0 = arith.constant 0 : index
    %0 = vector.load %arg2[%c0, %c0_0] : memref<4x32xf32, #tpu.memory_space<vmem>>, vector<4x32xf32>
    %1 = arith.mulf %0, %0 : vector<4x32xf32>
    %cst = arith.constant dense<0.000000e+00> : vector<4xf32>
    %2 = vector.multi_reduction <add>, %1, %cst [1] : vector<4x32xf32> to vector<4xf32>
    %3 = vector.shape_cast %2 : vector<4xf32> to vector<1x4xf32>
    %c0_1 = arith.constant 0 : index
    %c0_2 = arith.constant 0 : index
    %4 = vector.load %arg0[%c0_1, %c0_2] : memref<8x32xf32, #tpu.memory_space<vmem>>, vector<8x32xf32>
    %c0_3 = arith.constant 0 : index
    %c0_4 = arith.constant 0 : index
    %5 = vector.load %arg3[%c0_3, %c0_4] : memref<32x1xi32, #tpu.memory_space<vmem>>, vector<8x1xi32>
    %cst_5 = arith.constant dense<0.000000e+00> : vector<8x4xf32>
    %6 = tpu.matmul %4, %0, %cst_5 {dimension_numbers = #tpu.dot_dimension_numbers<[1], [1], [0], [0], [0, 0, 1, 0], [], []>} : vector<8x32xf32>, vector<4x32xf32>, vector<8x4xf32> -> vector<8x4xf32>
    %7 = arith.mulf %4, %4 : vector<8x32xf32>
    %cst_6 = arith.constant dense<0.000000e+00> : vector<8xf32>
    %8 = vector.multi_reduction <add>, %7, %cst_6 [1] : vector<8x32xf32> to vector<8xf32>
    %9 = vector.shape_cast %8 : vector<8xf32> to vector<8x1xf32>
    %cst_7 = arith.constant 2.000000e+00 : f32
    %10 = vector.broadcast %cst_7 : f32 to vector<8x4xf32>
    %11 = arith.mulf %10, %6 : vector<8x4xf32>
    %12 = vector.broadcast %9 : vector<8x1xf32> to vector<8x4xf32>
    %13 = arith.subf %11, %12 : vector<8x4xf32>
    %14 = vector.broadcast %3 : vector<1x4xf32> to vector<8x4xf32>
    %15 = arith.subf %13, %14 : vector<8x4xf32>
    %cst_8 = arith.constant dense<0xFF800000> : vector<8xf32>
    %16 = vector.multi_reduction <maximumf>, %15, %cst_8 [1] : vector<8x4xf32> to vector<8xf32>
    %17 = vector.shape_cast %16 : vector<8xf32> to vector<8x1xf32>
    %18 = vector.broadcast %17 : vector<8x1xf32> to vector<8x4xf32>
    %19 = arith.subf %15, %18 : vector<8x4xf32>
    %20 = math.exp %19 : vector<8x4xf32>
    %cst_9 = arith.constant dense<0.000000e+00> : vector<8xf32>
    %21 = vector.multi_reduction <add>, %20, %cst_9 [1] : vector<8x4xf32> to vector<8xf32>
    %22 = vector.shape_cast %21 : vector<8xf32> to vector<8x1xf32>
    %23 = math.log %22 : vector<8x1xf32>
    %24 = arith.addf %17, %23 : vector<8x1xf32>
    %25 = tpu.iota {dimensions = array<i32: 1>} : vector<8x4xi32>
    %26 = vector.broadcast %5 : vector<8x1xi32> to vector<8x4xi32>
    %27 = arith.cmpi eq, %25, %26 : vector<8x4xi32>
    %cst_10 = arith.constant 0.000000e+00 : f32
    %28 = vector.broadcast %cst_10 : f32 to vector<8x4xf32>
    %29 = arith.select %27, %15, %28 : vector<8x4xi1>, vector<8x4xf32>
    %cst_11 = arith.constant dense<0.000000e+00> : vector<8xf32>
    %30 = vector.multi_reduction <add>, %29, %cst_11 [1] : vector<8x4xf32> to vector<8xf32>
    %31 = vector.shape_cast %30 : vector<8xf32> to vector<8x1xf32>
    %32 = arith.subf %24, %31 : vector<8x1xf32>
    %33 = vector.broadcast %17 : vector<8x1xf32> to vector<8x4xf32>
    %34 = arith.cmpf oge, %15, %33 : vector<8x4xf32>
    %c4_i32 = arith.constant 4 : i32
    %35 = vector.broadcast %c4_i32 : i32 to vector<8x4xi32>
    %36 = arith.select %34, %25, %35 : vector<8x4xi1>, vector<8x4xi32>
    %cst_12 = arith.constant dense<2147483647> : vector<8xi32>
    %37 = vector.multi_reduction <minsi>, %36, %cst_12 [1] : vector<8x4xi32> to vector<8xi32>
    %38 = vector.shape_cast %37 : vector<8xi32> to vector<8x1xi32>
    %39 = arith.cmpi eq, %38, %5 : vector<8x1xi32>
    %40 = arith.extui %39 : vector<8x1xi1> to vector<8x1xi32>
    %41 = arith.sitofp %40 : vector<8x1xi32> to vector<8x1xf32>
    %42 = vector.shape_cast %32 : vector<8x1xf32> to vector<1x8x1xf32>
    %cst_13 = arith.constant dense<0.000000e+00> : vector<1xf32>
    %43 = vector.multi_reduction <add>, %42, %cst_13 [1, 2] : vector<1x8x1xf32> to vector<1xf32>
    %44 = vector.shape_cast %43 : vector<1xf32> to vector<1x1x1xf32>
    %45 = vector.extract %44[0, 0, 0] : f32 from vector<1x1x1xf32>
    %46 = vector.shape_cast %41 : vector<8x1xf32> to vector<1x8x1xf32>
    %cst_14 = arith.constant dense<0.000000e+00> : vector<1xf32>
    %47 = vector.multi_reduction <add>, %46, %cst_14 [1, 2] : vector<1x8x1xf32> to vector<1xf32>
    %48 = vector.shape_cast %47 : vector<1xf32> to vector<1x1x1xf32>
    %49 = vector.extract %48[0, 0, 0] : f32 from vector<1x1x1xf32>
    %c0_15 = arith.constant 0 : index
    %c0_16 = arith.constant 0 : index
    %50 = vector.load %arg1[%c0_15, %c0_16] : memref<24x32xf32, #tpu.memory_space<vmem>>, vector<24x32xf32>
    %c8 = arith.constant 8 : index
    %c0_17 = arith.constant 0 : index
    %51 = vector.load %arg3[%c8, %c0_17] : memref<32x1xi32, #tpu.memory_space<vmem>>, vector<24x1xi32>
    %cst_18 = arith.constant dense<0.000000e+00> : vector<24x4xf32>
    %52 = tpu.matmul %50, %0, %cst_18 {dimension_numbers = #tpu.dot_dimension_numbers<[1], [1], [0], [0], [0, 0, 1, 0], [], []>} : vector<24x32xf32>, vector<4x32xf32>, vector<24x4xf32> -> vector<24x4xf32>
    %53 = arith.mulf %50, %50 : vector<24x32xf32>
    %cst_19 = arith.constant dense<0.000000e+00> : vector<24xf32>
    %54 = vector.multi_reduction <add>, %53, %cst_19 [1] : vector<24x32xf32> to vector<24xf32>
    %55 = vector.shape_cast %54 : vector<24xf32> to vector<24x1xf32>
    %cst_20 = arith.constant 2.000000e+00 : f32
    %56 = vector.broadcast %cst_20 : f32 to vector<24x4xf32>
    %57 = arith.mulf %56, %52 : vector<24x4xf32>
    %58 = vector.broadcast %55 : vector<24x1xf32> to vector<24x4xf32>
    %59 = arith.subf %57, %58 : vector<24x4xf32>
    %60 = vector.broadcast %3 : vector<1x4xf32> to vector<24x4xf32>
    %61 = arith.subf %59, %60 : vector<24x4xf32>
    %cst_21 = arith.constant dense<0xFF800000> : vector<24xf32>
    %62 = vector.multi_reduction <maximumf>, %61, %cst_21 [1] : vector<24x4xf32> to vector<24xf32>
    %63 = vector.shape_cast %62 : vector<24xf32> to vector<24x1xf32>
    %64 = vector.broadcast %63 : vector<24x1xf32> to vector<24x4xf32>
    %65 = arith.subf %61, %64 : vector<24x4xf32>
    %66 = math.exp %65 : vector<24x4xf32>
    %cst_22 = arith.constant dense<0.000000e+00> : vector<24xf32>
    %67 = vector.multi_reduction <add>, %66, %cst_22 [1] : vector<24x4xf32> to vector<24xf32>
    %68 = vector.shape_cast %67 : vector<24xf32> to vector<24x1xf32>
    %69 = math.log %68 : vector<24x1xf32>
    %70 = arith.addf %63, %69 : vector<24x1xf32>
    %71 = tpu.iota {dimensions = array<i32: 1>} : vector<24x4xi32>
    %72 = vector.broadcast %51 : vector<24x1xi32> to vector<24x4xi32>
    %73 = arith.cmpi eq, %71, %72 : vector<24x4xi32>
    %cst_23 = arith.constant 0.000000e+00 : f32
    %74 = vector.broadcast %cst_23 : f32 to vector<24x4xf32>
    %75 = arith.select %73, %61, %74 : vector<24x4xi1>, vector<24x4xf32>
    %cst_24 = arith.constant dense<0.000000e+00> : vector<24xf32>
    %76 = vector.multi_reduction <add>, %75, %cst_24 [1] : vector<24x4xf32> to vector<24xf32>
    %77 = vector.shape_cast %76 : vector<24xf32> to vector<24x1xf32>
    %78 = arith.subf %70, %77 : vector<24x1xf32>
    %79 = vector.broadcast %63 : vector<24x1xf32> to vector<24x4xf32>
    %80 = arith.cmpf oge, %61, %79 : vector<24x4xf32>
    %c4_i32_25 = arith.constant 4 : i32
    %81 = vector.broadcast %c4_i32_25 : i32 to vector<24x4xi32>
    %82 = arith.select %80, %71, %81 : vector<24x4xi1>, vector<24x4xi32>
    %cst_26 = arith.constant dense<2147483647> : vector<24xi32>
    %83 = vector.multi_reduction <minsi>, %82, %cst_26 [1] : vector<24x4xi32> to vector<24xi32>
    %84 = vector.shape_cast %83 : vector<24xi32> to vector<24x1xi32>
    %85 = arith.cmpi eq, %84, %51 : vector<24x1xi32>
    %86 = arith.extui %85 : vector<24x1xi1> to vector<24x1xi32>
    %87 = arith.sitofp %86 : vector<24x1xi32> to vector<24x1xf32>
    %88 = vector.shape_cast %78 : vector<24x1xf32> to vector<1x24x1xf32>
    %cst_27 = arith.constant dense<0.000000e+00> : vector<1xf32>
    %89 = vector.multi_reduction <add>, %88, %cst_27 [1, 2] : vector<1x24x1xf32> to vector<1xf32>
    %90 = vector.shape_cast %89 : vector<1xf32> to vector<1x1x1xf32>
    %91 = vector.extract %90[0, 0, 0] : f32 from vector<1x1x1xf32>
    %92 = vector.shape_cast %87 : vector<24x1xf32> to vector<1x24x1xf32>
    %cst_28 = arith.constant dense<0.000000e+00> : vector<1xf32>
    %93 = vector.multi_reduction <add>, %92, %cst_28 [1, 2] : vector<1x24x1xf32> to vector<1xf32>
    %94 = vector.shape_cast %93 : vector<1xf32> to vector<1x1x1xf32>
    %95 = vector.extract %94[0, 0, 0] : f32 from vector<1x1x1xf32>
    %cst_29 = arith.constant 8.000000e+00 : f32
    %96 = arith.divf %45, %cst_29 : f32
    %cst_30 = arith.constant 8.000000e+00 : f32
    %97 = arith.divf %49, %cst_30 : f32
    %cst_31 = arith.constant 2.400000e+01 : f32
    %98 = arith.divf %91, %cst_31 : f32
    %cst_32 = arith.constant 2.400000e+01 : f32
    %99 = arith.divf %95, %cst_32 : f32
    %100 = arith.addf %45, %91 : f32
    %cst_33 = arith.constant 3.200000e+01 : f32
    %101 = arith.divf %100, %cst_33 : f32
    %c0_34 = arith.constant 0 : index
    %102 = memref.load %arg4[%c0_34] : memref<8xf32, #tpu.memory_space<smem>>
    memref.store %101, %arg4[%c0_34] : memref<8xf32, #tpu.memory_space<smem>>
    %c1 = arith.constant 1 : index
    %103 = memref.load %arg4[%c1] : memref<8xf32, #tpu.memory_space<smem>>
    memref.store %96, %arg4[%c1] : memref<8xf32, #tpu.memory_space<smem>>
    %c2 = arith.constant 2 : index
    %104 = memref.load %arg4[%c2] : memref<8xf32, #tpu.memory_space<smem>>
    memref.store %97, %arg4[%c2] : memref<8xf32, #tpu.memory_space<smem>>
    %c3 = arith.constant 3 : index
    %105 = memref.load %arg4[%c3] : memref<8xf32, #tpu.memory_space<smem>>
    memref.store %98, %arg4[%c3] : memref<8xf32, #tpu.memory_space<smem>>
    %c4 = arith.constant 4 : index
    %106 = memref.load %arg4[%c4] : memref<8xf32, #tpu.memory_space<smem>>
    memref.store %99, %arg4[%c4] : memref<8xf32, #tpu.memory_space<smem>>
    %cst_35 = arith.constant 0.000000e+00 : f32
    %c5 = arith.constant 5 : index
    %107 = memref.load %arg4[%c5] : memref<8xf32, #tpu.memory_space<smem>>
    memref.store %cst_35, %arg4[%c5] : memref<8xf32, #tpu.memory_space<smem>>
    %cst_36 = arith.constant 0.000000e+00 : f32
    %c6 = arith.constant 6 : index
    %108 = memref.load %arg4[%c6] : memref<8xf32, #tpu.memory_space<smem>>
    memref.store %cst_36, %arg4[%c6] : memref<8xf32, #tpu.memory_space<smem>>
    %cst_37 = arith.constant 0.000000e+00 : f32
    %c7 = arith.constant 7 : index
    %109 = memref.load %arg4[%c7] : memref<8xf32, #tpu.memory_space<smem>>
    memref.store %cst_37, %arg4[%c7] : memref<8xf32, #tpu.memory_space<smem>>
    return
  }
}

</mosaic_0001>

<llo_original>
// kernel: tpu_custom_call.1
$region0: #{tpu_custom_call.1}
  #allocation0 [shape = 'u32[]', space=smem, size = 0x4, offset = 0x4, fixed_abs, tag = 'smem constant byte address 0x4 - core index']
  #allocation1 [shape = 'u32[144,128]{1,0:T(1,128)}', space=vmem, size = 0x12000, scoped, tag = 'internal scratch']
  %s0 = inlined_call_operand.vmem [shape: f32[8,32], index: 0, kind: input, shape index: {}]
  %s1 = inlined_call_operand.vmem [shape: f32[24,32], index: 1, kind: input, shape index: {}]
  %s2 = inlined_call_operand.vmem [shape: f32[4,32], index: 2, kind: input, shape index: {}]
  %s3 = inlined_call_operand.vmem [shape: s32[32,1], index: 3, kind: input, shape index: {}]
  %s4 = inlined_call_operand.hbm [shape: f32[8], index: 4, kind: output, shape index: {}]
  %s5 = sld [smem:[#allocation0]]
  $region26: #{tpu_custom_call.1} parent=0
    _
  %s7 = ssub.s32 1, %s5
  %s8 = scalar_select 0, %s7, %s5
  $region1: #{tpu_custom_call.1} parent=0
    #allocation2 [shape = 'u8[512]{0}', space=smem, size = 0x200, scoped, tag = 'output window, operand 0, single buffered']
    #allocation3 [shape = 's32[1]{0}', space=sflag, size = 0x4, scoped, tag = 'scoped memory for tpu_custom_call.1']
    %9 = vsyncpa [#allocation3], 0
    // Predicated region
    $region2: #{tpu_custom_call.1} parent=1 // pred_check
      _
    $region3: #{tpu_custom_call.1} parent=1 // pred_check_branch
      %11 = sbr.rel (0) target = $region5
    $region4: #{tpu_custom_call.1} parent=1 // pred_region
      _
    $region5: #{tpu_custom_call.1} parent=1 // pred_fallthru
      _
    // Predicated region
    $region6: #{tpu_custom_call.1} parent=1 // pred_check
      _
    $region7: #{tpu_custom_call.1} parent=1 // pred_check_branch
      %13 = sbr.rel (0) target = $region9
    $region8: #{tpu_custom_call.1} parent=1 // pred_region
      _
    $region9: #{tpu_custom_call.1} parent=1 // pred_fallthru
      _
    // Predicated region
    $region10: #{tpu_custom_call.1} parent=1 // pred_check
      _
    $region11: #{tpu_custom_call.1} parent=1 // pred_check_branch
      %15 = sbr.rel (0) target = $region13
    $region12: #{tpu_custom_call.1} parent=1 // pred_region
      _
    $region13: #{tpu_custom_call.1} parent=1 // pred_fallthru
      _
    // Predicated region
    $region14: #{tpu_custom_call.1} parent=1 // pred_check
      _
    $region15: #{tpu_custom_call.1} parent=1 // pred_check_branch
      %17 = sbr.rel (0) target = $region17
    $region16: #{tpu_custom_call.1} parent=1 // pred_region
      _
    $region17: #{tpu_custom_call.1} parent=1 // pred_fallthru
      _
    %v18 = vld [vmem:[%s2] sm:$0xf]
    %v19 = vmul.f32 %v18, %v18
    %vm20 = vcmask 257024
    %v21 = vsel %vm20, %v19, 0.0
    %22 = vadd.xlane.f32.xlu0 %v21
    %v23 = vpop.xlane.xlu0 %22
    %v24 = vld [vmem:[%s0] sm:$0xff]
    %v25 = vld [vmem:[%s3] sm:$0xff]
    %vm26 = vcmask 261120
    %v28 = vsel %vm26, %v24, 0
    %v31 = vsel %vm26, %v18, 0
    %33 = vmatprep.subr.mxu0 0.0
    %34 = vmatpush1.xpose.msra.mxu0 0.0
    %35 = vmatprep.subr.mxu0 0.0
    %36 = vmatpush1.xpose.msra.mxu0 0.0
    %37 = vmatprep.subr.mxu0 0.0
    %38 = vmatpush1.xpose.msra.mxu0 0.0
    %39 = vmatprep.subr.mxu0 0.0
    %40 = vmatpush1.xpose.msra.mxu0 0.0
    %41 = vmatprep.subr.mxu0 0.0
    %42 = vmatpush1.xpose.msra.mxu0 0.0
    %43 = vmatprep.subr.mxu0 0.0
    %44 = vmatpush1.xpose.msra.mxu0 0.0
    %45 = vmatprep.subr.mxu0 0.0
    %46 = vmatpush1.xpose.msra.mxu0 0.0
    %47 = vmatprep.subr.mxu0 0.0
    %48 = vmatpush1.xpose.msra.mxu0 0.0
    %49 = vmatprep.subr.mxu0 0.0
    %50 = vmatpush1.xpose.msra.mxu0 0.0
    %51 = vmatprep.subr.mxu0 0.0
    %52 = vmatpush1.xpose.msra.mxu0 0.0
    %53 = vmatprep.subr.mxu0 0.0
    %54 = vmatpush1.xpose.msra.mxu0 0.0
    %55 = vmatprep.subr.mxu0 0.0
    %56 = vmatpush1.xpose.msra.mxu0 0.0
    %57 = vmatprep.subr.mxu0 0.0
    %58 = vmatpush1.xpose.msra.mxu0 0.0
    %59 = vmatprep.subr.mxu0 0.0
    %60 = vmatpush1.xpose.msra.mxu0 0.0
    %61 = vmatprep.subr.mxu0 0.0
    %62 = vmatpush1.xpose.msra.mxu0 0.0
    %63 = vmatprep.subr.mxu0 0.0
    %64 = vmatpush1.xpose.msra.mxu0 %v31
    %65 = vmatprep.subr.mxu0 0.0
    %66 = vmatpush2.xpose.msra.mxu0 0.0
    %67 = vmatprep.subr.mxu0 0.0
    %68 = vmatpush2.xpose.msra.mxu0 0.0
    %69 = vmatprep.subr.mxu0 0.0
    %70 = vmatpush2.xpose.msra.mxu0 0.0
    %71 = vmatprep.subr.mxu0 0.0
    %72 = vmatpush2.xpose.msra.mxu0 0.0
    %73 = vmatprep.subr.mxu0 0.0
    %74 = vmatpush2.xpose.msra.mxu0 0.0
    %75 = vmatprep.subr.mxu0 0.0
    %76 = vmatpush2.xpose.msra.mxu0 0.0
    %77 = vmatprep.subr.mxu0 0.0
    %78 = vmatpush2.xpose.msra.mxu0 0.0
    %79 = vmatprep.subr.mxu0 0.0
    %80 = vmatpush2.xpose.msra.mxu0 0.0
    %81 = vmatprep.subr.mxu0 0.0
    %82 = vmatpush2.xpose.msra.mxu0 0.0
    %83 = vmatprep.subr.mxu0 0.0
    %84 = vmatpush2.xpose.msra.mxu0 0.0
    %85 = vmatprep.subr.mxu0 0.0
    %86 = vmatpush2.xpose.msra.mxu0 0.0
    %87 = vmatprep.subr.mxu0 0.0
    %88 = vmatpush2.xpose.msra.mxu0 0.0
    %89 = vmatprep.subr.mxu0 0.0
    %90 = vmatpush2.xpose.msra.mxu0 0.0
    %91 = vmatprep.subr.mxu0 0.0
    %92 = vmatpush2.xpose.msra.mxu0 0.0
    %93 = vmatprep.subr.mxu0 0.0
    %94 = vmatpush2.xpose.msra.mxu0 0.0
    %95 = vmatprep.subr.mxu0 0.0
    %96 = vmatpush2.xpose.msra.mxu0 0.0
    %97 = vmatprep.mubr.f32.mxu0 0.0
    %98 = vmatmul.mubr.f32.gmra.mxu0 %v28
    %v99 = vpop.f32.mrf.mxu0
    %v100 = vadd.f32 0.0, %v99
    %v101 = vpop.f32.mrf.mxu0
    %102 = vdwg.mxu0
    %v103 = vmul.f32 %v24, %v24
    %v104 = vsel %vm26, %v103, 0.0
    %105 = vadd.xlane.f32.xlu0 %v104
    %v106 = vpop.xlane.xlu0 %105
    %v107 = vmul.f32 %v100, 2.0
    %v108 = vsub.f32 %v107, %v106
    %v110 = vlaneseq
    %v111 = vand.u32 %v110, 127
    %v112 = vlaneseq
    %v113 = vshrl.u32 %v112, 7
    %v114 = vsub.s32 %v111, %v113
    %v115 = vrot.slane %v23, %v114
    %vm116 = vcmask 1042434
    %v117 = vsel %vm116, %v115, %v115
    %vm118 = vcmask 1043459
    %v119 = vsel %vm118, %v115, %v117
    %vm120 = vcmask 1044484
    %v121 = vsel %vm120, %v115, %v119
    %vm122 = vcmask 1045509
    %v123 = vsel %vm122, %v115, %v121
    %vm124 = vcmask 1046534
    %v125 = vsel %vm124, %v115, %v123
    %vm126 = vcmask 1047559
    %v127 = vsel %vm126, %v115, %v125
    %v129 = vsub.f32 %v108, %v127
    %vm130 = vcmask 31744
    %v131 = vsel %vm130, %v129, -inf
    %132 = vmax.xlane.f32.xlu0 %v131
    %v133 = vpop.xlane.xlu0 %132
    %v134 = vsub.f32 %v129, %v133
    %v135 = vmul.f32 %v134, 1.442695
    %v136 = vpow.pop %v135
    %v137 = vsel %vm130, %v136, 0.0
    %138 = vadd.xlane.f32.xlu0 %v137
    %v139 = vpop.xlane.xlu0 %138
    %v140 = vlog2.pop %v139
    %v141 = vmul.f32 %v140, 0.6931472
    %v142 = vadd.f32 %v133, %v141
    %143 = vset.pattern.permute.xlu0 0
    %144 = vperm.xlu0 %143, %v25
    %v145 = vpop.permute.xlu0 %144
    %vm146 = vcmp.eq.s32.totalorder %v111, %v145
    %v147 = vsel %vm146, %v129, 0.0
    %v148 = vsel %vm130, %v147, 0.0
    %149 = vadd.xlane.f32.xlu0 %v148
    %v150 = vpop.xlane.xlu0 %149
    %v151 = vsub.f32 %v142, %v150
    %vm152 = vcmp.ge.f32.partialorder %v129, %v133
    %v153 = vsel %vm152, %v111, 4
    %v154 = vsel %vm130, %v153, 2147483647
    %v155 = vand.u32 %v154, 65535
    %v156 = vshra.s32 %v154, 16
    %v157 = vcvt.s32.f32 %v155
    %v158 = vcvt.s32.f32 %v156
    %159 = vmin.xlane.f32.xlu0 %v158
    %v160 = vpop.xlane.xlu0 %159
    %vm161 = vcmp.eq.f32.partialorder %v158, %v160
    %v162 = vsel %vm161, %v157, inf
    %163 = vmin.xlane.f32.xlu0 %v162
    %v164 = vpop.xlane.xlu0 %163
    %v165 = vcvt.f32.s32 %v164
    %v166 = vcvt.f32.s32 %v160
    %v167 = vshll.u32 %v166, 16
    %v168 = vadd.s32 %v167, %v165
    %vm169 = vcmp.eq.s32.totalorder %v168, %v25
    %v170 = vsel %vm169, 1, 0
    %v171 = vcvt.s32.f32 %v170
    %vm172 = vcmask 7168
    %v173 = vsel %vm172, %v151, 0.0
    %174 = vadd.xlane.f32.xlu0 %v173
    %v175 = vpop.xlane.xlu0 %174
    %v176 = vrot.slane %v175, 4
    %v177 = vadd.f32 %v175, %v176
    %v178 = vrot.slane %v177, 2
    %v179 = vadd.f32 %v177, %v178
    %v180 = vrot.slane %v179, 1
    %v181 = vadd.f32 %v179, %v180
    %s182 = vtos %v181
    %v183 = vsel %vm172, %v171, 0.0
    %184 = vadd.xlane.f32.xlu0 %v183
    %v185 = vpop.xlane.xlu0 %184
    %v186 = vrot.slane %v185, 4
    %v187 = vadd.f32 %v185, %v186
    %v188 = vrot.slane %v187, 2
    %v189 = vadd.f32 %v187, %v188
    %v190 = vrot.slane %v189, 1
    %v191 = vadd.f32 %v189, %v190
    %s192 = vtos %v191
    %v193 = vld [vmem:[%s1] sm:$0xff]
    %v194 = vld [vmem:[%s1 + $0x8] sm:$0xff]
    %v195 = vld [vmem:[%s1 + $0x10] sm:$0xff]
    %v196 = vld [vmem:[%s3 + $0x8] sm:$0xff]
    %v197 = vld [vmem:[%s3 + $0x10] sm:$0xff]
    %v198 = vld [vmem:[%s3 + $0x18] sm:$0xff]
    %v200 = vsel %vm26, %v193, 0
    %v203 = vsel %vm26, %v194, 0
    %v206 = vsel %vm26, %v195, 0
    %208 = vmatprep.subr.mxu0 0.0
    %209 = vmatpush1.xpose.msra.mxu0 0.0
    %210 = vmatprep.subr.mxu0 0.0
    %211 = vmatpush1.xpose.msra.mxu0 0.0
    %212 = vmatprep.subr.mxu0 0.0
    %213 = vmatpush1.xpose.msra.mxu0 0.0
    %214 = vmatprep.subr.mxu0 0.0
    %215 = vmatpush1.xpose.msra.mxu0 0.0
    %216 = vmatprep.subr.mxu0 0.0
    %217 = vmatpush1.xpose.msra.mxu0 0.0
    %218 = vmatprep.subr.mxu0 0.0
    %219 = vmatpush1.xpose.msra.mxu0 0.0
    %220 = vmatprep.subr.mxu0 0.0
    %221 = vmatpush1.xpose.msra.mxu0 0.0
    %222 = vmatprep.subr.mxu0 0.0
    %223 = vmatpush1.xpose.msra.mxu0 0.0
    %224 = vmatprep.subr.mxu0 0.0
    %225 = vmatpush1.xpose.msra.mxu0 0.0
    %226 = vmatprep.subr.mxu0 0.0
    %227 = vmatpush1.xpose.msra.mxu0 0.0
    %228 = vmatprep.subr.mxu0 0.0
    %229 = vmatpush1.xpose.msra.mxu0 0.0
    %230 = vmatprep.subr.mxu0 0.0
    %231 = vmatpush1.xpose.msra.mxu0 0.0
    %232 = vmatprep.subr.mxu0 0.0
    %233 = vmatpush1.xpose.msra.mxu0 0.0
    %234 = vmatprep.subr.mxu0 0.0
    %235 = vmatpush1.xpose.msra.mxu0 0.0
    %236 = vmatprep.subr.mxu0 0.0
    %237 = vmatpush1.xpose.msra.mxu0 0.0
    %238 = vmatprep.subr.mxu0 0.0
    %239 = vmatpush1.xpose.msra.mxu0 %v31
    %240 = vmatprep.subr.mxu0 0.0
    %241 = vmatpush2.xpose.msra.mxu0 0.0
    %242 = vmatprep.subr.mxu0 0.0
    %243 = vmatpush2.xpose.msra.mxu0 0.0
    %244 = vmatprep.subr.mxu0 0.0
    %245 = vmatpush2.xpose.msra.mxu0 0.0
    %246 = vmatprep.subr.mxu0 0.0
    %247 = vmatpush2.xpose.msra.mxu0 0.0
    %248 = vmatprep.subr.mxu0 0.0
    %249 = vmatpush2.xpose.msra.mxu0 0.0
    %250 = vmatprep.subr.mxu0 0.0
    %251 = vmatpush2.xpose.msra.mxu0 0.0
    %252 = vmatprep.subr.mxu0 0.0
    %253 = vmatpush2.xpose.msra.mxu0 0.0
    %254 = vmatprep.subr.mxu0 0.0
    %255 = vmatpush2.xpose.msra.mxu0 0.0
    %256 = vmatprep.subr.mxu0 0.0
    %257 = vmatpush2.xpose.msra.mxu0 0.0
    %258 = vmatprep.subr.mxu0 0.0
    %259 = vmatpush2.xpose.msra.mxu0 0.0
    %260 = vmatprep.subr.mxu0 0.0
    %261 = vmatpush2.xpose.msra.mxu0 0.0
    %262 = vmatprep.subr.mxu0 0.0
    %263 = vmatpush2.xpose.msra.mxu0 0.0
    %264 = vmatprep.subr.mxu0 0.0
    %265 = vmatpush2.xpose.msra.mxu0 0.0
    %266 = vmatprep.subr.mxu0 0.0
    %267 = vmatpush2.xpose.msra.mxu0 0.0
    %268 = vmatprep.subr.mxu0 0.0
    %269 = vmatpush2.xpose.msra.mxu0 0.0
    %270 = vmatprep.subr.mxu0 0.0
    %271 = vmatpush2.xpose.msra.mxu0 0.0
    %272 = vmatprep.mubr.f32.mxu0 0.0
    %273 = vmatmul.mubr.f32.gmra.mxu0 %v200
    %v274 = vpop.f32.mrf.mxu0
    %v275 = vadd.f32 0.0, %v274
    %v276 = vpop.f32.mrf.mxu0
    %277 = vmatprep.mubr.f32.mxu0 0.0
    %278 = vmatmul.mubr.f32.gmra.mxu0 %v203
    %v279 = vpop.f32.mrf.mxu0
    %v280 = vadd.f32 0.0, %v279
    %v281 = vpop.f32.mrf.mxu0
    %282 = vmatprep.mubr.f32.mxu0 0.0
    %283 = vmatmul.mubr.f32.gmra.mxu0 %v206
    %v284 = vpop.f32.mrf.mxu0
    %v285 = vadd.f32 0.0, %v284
    %v286 = vpop.f32.mrf.mxu0
    %287 = vdwg.mxu0
    %v288 = vmul.f32 %v193, %v193
    %v289 = vmul.f32 %v194, %v194
    %v290 = vmul.f32 %v195, %v195
    %v291 = vsel %vm26, %v288, 0.0
    %292 = vadd.xlane.f32.xlu0 %v291
    %v293 = vpop.xlane.xlu0 %292
    %v294 = vsel %vm26, %v289, 0.0
    %295 = vadd.xlane.f32.xlu0 %v294
    %v296 = vpop.xlane.xlu0 %295
    %v297 = vsel %vm26, %v290, 0.0
    %298 = vadd.xlane.f32.xlu0 %v297
    %v299 = vpop.xlane.xlu0 %298
    %v300 = vmul.f32 %v275, 2.0
    %v301 = vmul.f32 %v280, 2.0
    %v302 = vmul.f32 %v285, 2.0
    %v303 = vsub.f32 %v300, %v293
    %v304 = vsub.f32 %v301, %v296
    %v305 = vsub.f32 %v302, %v299
    %v306 = vsub.f32 %v303, %v127
    %v307 = vsub.f32 %v304, %v127
    %v308 = vsub.f32 %v305, %v127
    %v309 = vsel %vm130, %v306, -inf
    %310 = vmax.xlane.f32.xlu0 %v309
    %v311 = vpop.xlane.xlu0 %310
    %v312 = vsel %vm130, %v307, -inf
    %313 = vmax.xlane.f32.xlu0 %v312
    %v314 = vpop.xlane.xlu0 %313
    %v315 = vsel %vm130, %v308, -inf
    %316 = vmax.xlane.f32.xlu0 %v315
    %v317 = vpop.xlane.xlu0 %316
    %v318 = vsub.f32 %v306, %v311
    %v319 = vsub.f32 %v307, %v314
    %v320 = vsub.f32 %v308, %v317
    %v321 = vmul.f32 %v318, 1.442695
    %v322 = vpow.pop %v321
    %v323 = vmul.f32 %v319, 1.442695
    %v324 = vpow.pop %v323
    %v325 = vmul.f32 %v320, 1.442695
    %v326 = vpow.pop %v325
    %v327 = vsel %vm130, %v322, 0.0
    %328 = vadd.xlane.f32.xlu0 %v327
    %v329 = vpop.xlane.xlu0 %328
    %v330 = vsel %vm130, %v324, 0.0
    %331 = vadd.xlane.f32.xlu0 %v330
    %v332 = vpop.xlane.xlu0 %331
    %v333 = vsel %vm130, %v326, 0.0
    %334 = vadd.xlane.f32.xlu0 %v333
    %v335 = vpop.xlane.xlu0 %334
    %v336 = vlog2.pop %v329
    %v337 = vmul.f32 %v336, 0.6931472
    %v338 = vlog2.pop %v332
    %v339 = vmul.f32 %v338, 0.6931472
    %v340 = vlog2.pop %v335
    %v341 = vmul.f32 %v340, 0.6931472
    %v342 = vadd.f32 %v311, %v337
    %v343 = vadd.f32 %v314, %v339
    %v344 = vadd.f32 %v317, %v341
    %345 = vset.pattern.permute.xlu0 0
    %346 = vperm.xlu0 %345, %v196
    %v347 = vpop.permute.xlu0 %346
    %348 = vset.pattern.permute.xlu0 0
    %349 = vperm.xlu0 %348, %v197
    %v350 = vpop.permute.xlu0 %349
    %351 = vset.pattern.permute.xlu0 0
    %352 = vperm.xlu0 %351, %v198
    %v353 = vpop.permute.xlu0 %352
    %vm354 = vcmp.eq.s32.totalorder %v111, %v347
    %vm355 = vcmp.eq.s32.totalorder %v111, %v350
    %vm356 = vcmp.eq.s32.totalorder %v111, %v353
    %v357 = vsel %vm354, %v306, 0.0
    %v358 = vsel %vm355, %v307, 0.0
    %v359 = vsel %vm356, %v308, 0.0
    %v360 = vsel %vm130, %v357, 0.0
    %361 = vadd.xlane.f32.xlu0 %v360
    %v362 = vpop.xlane.xlu0 %361
    %v363 = vsel %vm130, %v358, 0.0
    %364 = vadd.xlane.f32.xlu0 %v363
    %v365 = vpop.xlane.xlu0 %364
    %v366 = vsel %vm130, %v359, 0.0
    %367 = vadd.xlane.f32.xlu0 %v366
    %v368 = vpop.xlane.xlu0 %367
    %v369 = vsub.f32 %v342, %v362
    %v370 = vsub.f32 %v343, %v365
    %v371 = vsub.f32 %v344, %v368
    %vm372 = vcmp.ge.f32.partialorder %v306, %v311
    %vm373 = vcmp.ge.f32.partialorder %v307, %v314
    %vm374 = vcmp.ge.f32.partialorder %v308, %v317
    %v375 = vsel %vm372, %v111, 4
    %v376 = vsel %vm373, %v111, 4
    %v377 = vsel %vm374, %v111, 4
    %v378 = vsel %vm130, %v375, 2147483647
    %v379 = vand.u32 %v378, 65535
    %v380 = vshra.s32 %v378, 16
    %v381 = vcvt.s32.f32 %v379
    %v382 = vcvt.s32.f32 %v380
    %383 = vmin.xlane.f32.xlu0 %v382
    %v384 = vpop.xlane.xlu0 %383
    %vm385 = vcmp.eq.f32.partialorder %v382, %v384
    %v386 = vsel %vm385, %v381, inf
    %387 = vmin.xlane.f32.xlu0 %v386
    %v388 = vpop.xlane.xlu0 %387
    %v389 = vcvt.f32.s32 %v388
    %v390 = vcvt.f32.s32 %v384
    %v391 = vshll.u32 %v390, 16
    %v392 = vadd.s32 %v391, %v389
    %v393 = vsel %vm130, %v376, 2147483647
    %v394 = vand.u32 %v393, 65535
    %v395 = vshra.s32 %v393, 16
    %v396 = vcvt.s32.f32 %v394
    %v397 = vcvt.s32.f32 %v395
    %398 = vmin.xlane.f32.xlu0 %v397
    %v399 = vpop.xlane.xlu0 %398
    %vm400 = vcmp.eq.f32.partialorder %v397, %v399
    %v401 = vsel %vm400, %v396, inf
    %402 = vmin.xlane.f32.xlu0 %v401
    %v403 = vpop.xlane.xlu0 %402
    %v404 = vcvt.f32.s32 %v403
    %v405 = vcvt.f32.s32 %v399
    %v406 = vshll.u32 %v405, 16
    %v407 = vadd.s32 %v406, %v404
    %v408 = vsel %vm130, %v377, 2147483647
    %v409 = vand.u32 %v408, 65535
    %v410 = vshra.s32 %v408, 16
    %v411 = vcvt.s32.f32 %v409
    %v412 = vcvt.s32.f32 %v410
    %413 = vmin.xlane.f32.xlu0 %v412
    %v414 = vpop.xlane.xlu0 %413
    %vm415 = vcmp.eq.f32.partialorder %v412, %v414
    %v416 = vsel %vm415, %v411, inf
    %417 = vmin.xlane.f32.xlu0 %v416
    %v418 = vpop.xlane.xlu0 %417
    %v419 = vcvt.f32.s32 %v418
    %v420 = vcvt.f32.s32 %v414
    %v421 = vshll.u32 %v420, 16
    %v422 = vadd.s32 %v421, %v419
    %vm423 = vcmp.eq.s32.totalorder %v392, %v196
    %vm424 = vcmp.eq.s32.totalorder %v407, %v197
    %vm425 = vcmp.eq.s32.totalorder %v422, %v198
    %v426 = vsel %vm423, 1, 0
    %v427 = vsel %vm424, 1, 0
    %v428 = vsel %vm425, 1, 0
    %v429 = vcvt.s32.f32 %v426
    %v430 = vcvt.s32.f32 %v427
    %v431 = vcvt.s32.f32 %v428
    %v432 = vsel %vm172, %v369, 0.0
    %v433 = vsel %vm172, %v370, 0.0
    %v434 = vadd.f32 %v432, %v433
    %v435 = vsel %vm172, %v371, 0.0
    %v436 = vadd.f32 %v434, %v435
    %437 = vadd.xlane.f32.xlu0 %v436
    %v438 = vpop.xlane.xlu0 %437
    %v439 = vrot.slane %v438, 4
    %v440 = vadd.f32 %v438, %v439
    %v441 = vrot.slane %v440, 2
    %v442 = vadd.f32 %v440, %v441
    %v443 = vrot.slane %v442, 1
    %v444 = vadd.f32 %v442, %v443
    %s445 = vtos %v444
    %v446 = vsel %vm172, %v429, 0.0
    %v447 = vsel %vm172, %v430, 0.0
    %v448 = vadd.f32 %v446, %v447
    %v449 = vsel %vm172, %v431, 0.0
    %v450 = vadd.f32 %v448, %v449
    %451 = vadd.xlane.f32.xlu0 %v450
    %v452 = vpop.xlane.xlu0 %451
    %v453 = vrot.slane %v452, 4
    %v454 = vadd.f32 %v452, %v453
    %v455 = vrot.slane %v454, 2
    %v456 = vadd.f32 %v454, %v455
    %v457 = vrot.slane %v456, 1
    %v458 = vadd.f32 %v456, %v457
    %s459 = vtos %v458
    %v460 = vrcp.pop 8.0
    %s461 = vtos %v460
    %s462 = smul.f32 %s182, %s461
    %v463 = vrcp.pop 8.0
    %s464 = vtos %v463
    %s465 = smul.f32 %s192, %s464
    %v466 = vrcp.pop 24.0
    %s467 = vtos %v466
    %s468 = smul.f32 %s445, %s467
    %v469 = vrcp.pop 24.0
    %s470 = vtos %v469
    %s471 = smul.f32 %s459, %s470
    %s472 = sadd.f32 %s182, %s445
    %v473 = vrcp.pop 32.0
    %s474 = vtos %v473
    %s475 = smul.f32 %s472, %s474
    %s476 = scalar_lea.smem [#allocation2], 0
    %477 = sst [smem:[%s476]] %s475
    %s478 = scalar_lea.smem [#allocation2], 1
    %479 = sst [smem:[%s478]] %s462
    %s480 = scalar_lea.smem [#allocation2], 2
    %481 = sst [smem:[%s480]] %s465
    %s482 = scalar_lea.smem [#allocation2], 3
    %483 = sst [smem:[%s482]] %s468
    %s484 = scalar_lea.smem [#allocation2], 4
    %485 = sst [smem:[%s484]] %s471
    %s486 = scalar_lea.smem [#allocation2], 5
    %487 = sst [smem:[%s486]] 0.0
    %s488 = scalar_lea.smem [#allocation2], 6
    %489 = sst [smem:[%s488]] 0.0
    %s490 = scalar_lea.smem [#allocation2], 7
    %491 = sst [smem:[%s490]] 0.0
    // Predicated region
    $region18: #{tpu_custom_call.1} parent=1 // pred_check
      _
    $region19: #{tpu_custom_call.1} parent=1 // pred_check_branch
      %493 = sbr.rel (0) target = $region21
    $region20: #{tpu_custom_call.1} parent=1 // pred_region
      %s495 = ssub.s32 16, 16
      %496 = vsyncadd [#allocation3], %s495
      %499 = dma.smem_to_hbm [#allocation2], 16, %s4, [#allocation3]
    $region21: #{tpu_custom_call.1} parent=1 // pred_fallthru
      _
    // Predicated region
    $region22: #{tpu_custom_call.1} parent=1 // pred_check
      _
    $region23: #{tpu_custom_call.1} parent=1 // pred_check_branch
      %501 = sbr.rel (0) target = $region25
    $region24: #{tpu_custom_call.1} parent=1 // pred_region
      %502 = dma.done [#allocation3], 16
    $region25: #{tpu_custom_call.1} parent=1 // pred_fallthru
      _
    %503 = sfence
    %504 = vsyncpa [#allocation3], 1

</llo_original>
